<compile_context>
chip_gen: v5e
topology: v5e:2x2
jax: 0.10.0
libtpu: 0.0.40
codegen_flags: <defaults>
</compile_context>

<pallas_src>
import functools
import math

import jax
import jax.numpy as jnp
from jax.experimental import pallas as pl
from jax.experimental.pallas import tpu as pltpu


def _round_up(x, m):
    return ((x + m - 1) // m) * m


def _cdiv(a, b):
    return -(-a // b)


def _min_row_block(dtype):
    # Sublane packing: f32 -> 8 rows, bf16 -> 16, int8/fp8 -> 32.
    return max(8, 32 // jnp.dtype(dtype).itemsize)


# ---------------------------------------------------------------------------
# Fused Pallas kernel: conv(as matmul) + fc1 + fc2 + fc3 (+ threshold)
# ---------------------------------------------------------------------------
def fused_mlp_conv_kernel(x_ref, wc_ref, bc_ref, w1_ref, b1_ref, w2_ref,
                          b2_ref, w3_ref, b3_ref, o_ref, *, training,
                          logit_threshold):
    # x:  (Br, L)  f32 (cast to bf16 in-kernel — removes the wrapper pad/cast)
    # wc: (L, TKp) bf16    w1: (TKp, Hp)   w2: (Hp, Hp)   w3: (Hp, O)
    # biases: (1, N) f32   out: (Br, O) bf16
    wdt = wc_ref.dtype
    x = x_ref[...].astype(wdt)

    # Conv1d + ReLU as one dense matmul against the shifted Toeplitz weight.
    feat = jnp.dot(x, wc_ref[...], preferred_element_type=jnp.float32)
    feat = jnp.maximum(feat + bc_ref[...], 0.0)                    # (Br, TKp)

    h = jnp.dot(feat.astype(wdt), w1_ref[...],
                preferred_element_type=jnp.float32)
    h = jnp.maximum(h + b1_ref[...], 0.0)                          # (Br, Hp)

    h = jnp.dot(h.astype(wdt), w2_ref[...],
                preferred_element_type=jnp.float32)
    h = jnp.maximum(h + b2_ref[...], 0.0)                          # (Br, Hp)

    logits = jnp.dot(h.astype(wdt), w3_ref[...],
                     preferred_element_type=jnp.float32)
    logits = logits + b3_ref[...]                                  # (Br, O)

    if training:
        o_ref[...] = jax.nn.sigmoid(logits).astype(o_ref.dtype)
    else:
        # sigmoid is monotonic: (sigmoid(z) > t) == (z > logit(t)).
        o_ref[...] = (logits > logit_threshold).astype(o_ref.dtype)


# ---------------------------------------------------------------------------
# One-time weight prepacking (off the hot path)
# ---------------------------------------------------------------------------
def pack_params(params, cfg, dtype=jnp.bfloat16):
    T, E, K = cfg["input_tokens"], cfg["embed_size"], cfg["kernel_count"]
    H = params["fc1_w"].shape[0]
    O = params["fc3_w"].shape[0]
    L = T * E
    ksize = 7 * E
    pad = (ksize - 1) // 2
    TK = T * K
    TKp = _round_up(TK, 128)
    Hp = _round_up(H, 128)

    # --- Conv1d weight -> banded/Toeplitz matrix (L, T*K), band SHIFTED by
    # `pad` so the raw (unpadded) x can be fed straight into the matmul:
    #   wc[i, t*K + k] = conv_w[k, 0, i - t*E + pad]  if in range, else 0.
    w = params["conv_w"].reshape(K, ksize).astype(jnp.float32)       # (K, 7E)
    rows = jnp.arange(L)[:, None]                                    # (L, 1)
    tpos = jnp.arange(T)[None, :]                                    # (1, T)
    j = rows - tpos * E + pad                                        # (L, T)
    valid = (j >= 0) & (j < ksize)
    jc = jnp.clip(j, 0, ksize - 1)
    wc = jnp.where(valid[:, :, None], w.T[jc], 0.0)                  # (L, T, K)
    wc = wc.reshape(L, TK)
    wc = jnp.pad(wc, ((0, 0), (0, TKp - TK)))

    bc = jnp.tile(params["conv_b"].astype(jnp.float32), T)           # idx t*K+k
    bc = jnp.pad(bc, (0, TKp - TK)).reshape(1, TKp)

    # --- fc1: PyTorch flattens conv output (B, K, T) -> index k*T + t; our
    # feature index is t*K + k, so permute the weight's input dimension. ---
    w1 = params["fc1_w"].astype(jnp.float32).reshape(H, K, T)
    w1 = jnp.transpose(w1, (2, 1, 0)).reshape(TK, H)
    w1 = jnp.pad(w1, ((0, TKp - TK), (0, Hp - H)))
    b1 = jnp.pad(params["fc1_b"].astype(jnp.float32), (0, Hp - H)).reshape(1, Hp)

    w2 = jnp.pad(params["fc2_w"].astype(jnp.float32).T,
                 ((0, Hp - H), (0, Hp - H)))
    b2 = jnp.pad(params["fc2_b"].astype(jnp.float32), (0, Hp - H)).reshape(1, Hp)

    # fc3: keep the narrow O-lane output (no 128 padding) — the (Br, O) store
    # is a masked vst but the HBM write stream shrinks ~8x.
    w3 = jnp.pad(params["fc3_w"].astype(jnp.float32).T, ((0, Hp - H), (0, 0)))
    b3 = params["fc3_b"].astype(jnp.float32).reshape(1, O)

    return {
        "wc": wc.astype(dtype), "bc": bc,
        "w1": w1.astype(dtype), "b1": b1,
        "w2": w2.astype(dtype), "b2": b2,
        "w3": w3.astype(dtype), "b3": b3,
    }


def _vmem_ceiling_bytes():
    """Generation-aware VMEM ceiling with headroom for Mosaic internals."""
    cap = 64 << 20  # conservative default (v7x physical per-TC)
    try:
        info = pltpu.get_tpu_info()
        cap = int(getattr(info, "vmem_capacity_bytes", cap))
    except Exception:
        pass
    return max(16 << 20, cap - (8 << 20))


def _choose_rows(B, block_rows, sub):
    """Pick (Br, Bp, steps): big row tiles, even step count >=2 when possible
    so the parallel batch axis splits evenly across v7x's two TensorCores."""
    Bp0 = _round_up(B, sub)
    br_cap = max(sub, min(_round_up(block_rows, sub), Bp0))
    steps = _cdiv(Bp0, br_cap)
    if Bp0 >= 2 * sub:
        steps = max(steps, 2)
        if steps % 2:
            steps += 1
    Br = _round_up(_cdiv(Bp0, steps), sub)
    Bp = Br * steps
    return Br, Bp, steps


# ---------------------------------------------------------------------------
# Forward wrapper (hot path: one pallas_call)
# ---------------------------------------------------------------------------
def simple_mlp_convolution(x, packed, cfg, *, training=False, block_rows=1024,
                           out_dtype=jnp.bfloat16):
    T, E = cfg["input_tokens"], cfg["embed_size"]
    thr = cfg["hyphen_threshold"]
    L = T * E

    TKp = packed["w1"].shape[0]
    Hp = packed["w2"].shape[0]
    O = packed["w3"].shape[1]
    wdtype = packed["wc"].dtype

    B = x.shape[0]
    x_flat = jnp.reshape(x, (B, L))          # contiguous reshape: no HBM copy

    sub = max(_min_row_block(x_flat.dtype), _min_row_block(out_dtype))
    Br, Bp, steps = _choose_rows(B, block_rows, sub)
    if Bp != B:
        x_flat = jnp.pad(x_flat, ((0, Bp - B), (0, 0)))

    grid = (steps,)
    weight_names = ("wc", "bc", "w1", "b1", "w2", "b2", "w3", "b3")
    weight_specs = [pl.BlockSpec(packed[n].shape, lambda i: (0, 0))
                    for n in weight_names]

    logit_thr = float(math.log(thr) - math.log1p(-thr))

    # VMEM budget from actual need: double-buffered input/output blocks,
    # resident weights, the f32/bf16 feat/h intermediates, plus scratch margin
    # — clamped to a generation-aware ceiling (<= ~56 MiB on v7x).
    out_isize = jnp.dtype(out_dtype).itemsize
    weights_bytes = sum(int(packed[n].size) * packed[n].dtype.itemsize
                        for n in weight_names)
    io_bytes = 2 * Br * L * x_flat.dtype.itemsize + 2 * Br * O * out_isize
    inter_bytes = Br * (TKp * 6 + Hp * 12 + O * 8)   # f32 + bf16 live copies
    need = weights_bytes + io_bytes + inter_bytes + (4 << 20)
    vmem_limit = int(min(_vmem_ceiling_bytes(), max(16 << 20, need)))

    # NOTE(v6e): if a trace shows exposed input DMA at very large Br, the
    # input spec below can take pipeline_mode=pl.Buffered(3) for deeper
    # buffering — not enabled by default.
    out = pl.pallas_call(
        functools.partial(fused_mlp_conv_kernel, training=training,
                          logit_threshold=logit_thr),
        out_shape=jax.ShapeDtypeStruct((Bp, O), out_dtype),
        grid=grid,
        in_specs=[pl.BlockSpec((Br, L), lambda i: (i, 0))] + weight_specs,
        out_specs=pl.BlockSpec((Br, O), lambda i: (i, 0)),
        compiler_params=pltpu.CompilerParams(
            dimension_semantics=("parallel",),
            vmem_limit_bytes=vmem_limit),
    )(x_flat, *(packed[n] for n in weight_names))

    return out[:B]


# ---------------------------------------------------------------------------
# Pure-JAX reference (for correctness check)
# ---------------------------------------------------------------------------
def reference(x, params, cfg, *, training=False):
    T, E, K = cfg["input_tokens"], cfg["embed_size"], cfg["kernel_count"]
    B = x.shape[0]
    L = T * E
    pad = (7 * E - 1) // 2
    x_ncl = x.reshape(B, 1, L).astype(jnp.float32)
    conv = jax.lax.conv_general_dilated(
        x_ncl, params["conv_w"], window_strides=(E,), padding=[(pad, pad)],
        dimension_numbers=("NCH", "OIH", "NCH"))
    conv = jax.nn.relu(conv + params["conv_b"][None, :, None])      # (B, K, T)
    flat = conv.reshape(B, K * T)
    h = jax.nn.relu(flat @ params["fc1_w"].T + params["fc1_b"])
    h = jax.nn.relu(h @ params["fc2_w"].T + params["fc2_b"])
    y = jax.nn.sigmoid(h @ params["fc3_w"].T + params["fc3_b"])
    if training:
        return y
    return (y > cfg["hyphen_threshold"]).astype(jnp.float32)


if __name__ == "__main__":
    # Small shapes consistent with the module.
    T, E = 8, 8                  # input_tokens, embed_size
    K, H, O = 16, 32, 8          # kernel_count, hidden_size, output_size
    B = 32                       # batch (row-tile logic -> even 2-step grid)
    ksize = 7 * E
    cfg = dict(input_tokens=T, embed_size=E, kernel_count=K,
               hidden_size=H, output_size=O, hyphen_threshold=0.5)

    key = jax.random.PRNGKey(0)
    keys = jax.random.split(key, 9)
    params = {
        "conv_w": 0.1 * jax.random.normal(keys[0], (K, 1, ksize), jnp.float32),
        "conv_b": 0.1 * jax.random.normal(keys[1], (K,), jnp.float32),
        "fc1_w": 0.1 * jax.random.normal(keys[2], (H, T * K), jnp.float32),
        "fc1_b": 0.1 * jax.random.normal(keys[3], (H,), jnp.float32),
        "fc2_w": 0.1 * jax.random.normal(keys[4], (H, H), jnp.float32),
        "fc2_b": 0.1 * jax.random.normal(keys[5], (H,), jnp.float32),
        "fc3_w": 0.1 * jax.random.normal(keys[6], (O, H), jnp.float32),
        "fc3_b": 0.1 * jax.random.normal(keys[7], (O,), jnp.float32),
    }
    x = jax.random.normal(keys[8], (B, T, E), jnp.float32)

    # One-time prepacking (off the per-inference hot path).
    packed = pack_params(params, cfg, dtype=jnp.bfloat16)

    fwd_eval = jax.jit(lambda xx: simple_mlp_convolution(
        xx, packed, cfg, training=False))
    fwd_prob = jax.jit(lambda xx: simple_mlp_convolution(
        xx, packed, cfg, training=True))

    probs = jax.block_until_ready(fwd_prob(x))     # pre-threshold (training)
    out = jax.block_until_ready(fwd_eval(x))       # eval-mode hard threshold

    probs_f32 = probs.astype(jnp.float32)
    out_f32 = out.astype(jnp.float32)

    probs_ref = reference(x, params, cfg, training=True)
    out_ref = (probs_ref > cfg["hyphen_threshold"]).astype(jnp.float32)

    assert probs.shape == (B, O) and out.shape == (B, O)
    # Compare pre-threshold probabilities with a bf16-level tolerance.
    assert jnp.allclose(probs_f32, probs_ref, atol=3e-2, rtol=3e-2), \
        "probability mismatch vs reference"
    # Hard-thresholded outputs must match everywhere the reference probability
    # is not sitting essentially on the threshold (bf16 accumulation margin).
    stable = jnp.abs(probs_ref - cfg["hyphen_threshold"]) > 5e-3
    assert bool(jnp.all((out_f32 == out_ref) | ~stable)), \
        "thresholded output mismatch vs reference"

    print("KERNEL_OK")
</pallas_src>

<mosaic_0001>
module attributes {stable_mosaic.version = 11 : i64} {
  func.func @fused_mlp_conv_kernel(%arg0: i32, %arg1: memref<16x64xf32, #tpu.memory_space<vmem>>, %arg2: memref<64x128xbf16, #tpu.memory_space<vmem>>, %arg3: memref<1x128xf32, #tpu.memory_space<vmem>>, %arg4: memref<128x128xbf16, #tpu.memory_space<vmem>>, %arg5: memref<1x128xf32, #tpu.memory_space<vmem>>, %arg6: memref<128x128xbf16, #tpu.memory_space<vmem>>, %arg7: memref<1x128xf32, #tpu.memory_space<vmem>>, %arg8: memref<128x8xbf16, #tpu.memory_space<vmem>>, %arg9: memref<1x8xf32, #tpu.memory_space<vmem>>, %arg10: memref<16x8xbf16, #tpu.memory_space<vmem>>) attributes {dimension_semantics = [#tpu.dimension_semantics<parallel>], iteration_bounds = array<i64: 2>, scalar_prefetch = 0 : i64, scratch_operands = 0 : i64, tpu.core_type = #tpu.core_type<tc>, window_params = [{transform_indices = @transform_0, window_bounds = array<i64: 16, 64>}, {pipeline_mode = #tpu.pipeline_mode<synchronous>, transform_indices = @transform_1, window_bounds = array<i64: 64, 128>}, {pipeline_mode = #tpu.pipeline_mode<synchronous>, transform_indices = @transform_2, window_bounds = array<i64: 1, 128>}, {pipeline_mode = #tpu.pipeline_mode<synchronous>, transform_indices = @transform_3, window_bounds = array<i64: 128, 128>}, {pipeline_mode = #tpu.pipeline_mode<synchronous>, transform_indices = @transform_4, window_bounds = array<i64: 1, 128>}, {pipeline_mode = #tpu.pipeline_mode<synchronous>, transform_indices = @transform_5, window_bounds = array<i64: 128, 128>}, {pipeline_mode = #tpu.pipeline_mode<synchronous>, transform_indices = @transform_6, window_bounds = array<i64: 1, 128>}, {pipeline_mode = #tpu.pipeline_mode<synchronous>, transform_indices = @transform_7, window_bounds = array<i64: 128, 8>}, {pipeline_mode = #tpu.pipeline_mode<synchronous>, transform_indices = @transform_8, window_bounds = array<i64: 1, 8>}, {transform_indices = @transform_9, window_bounds = array<i64: 16, 8>}]} {
    %c0 = arith.constant 0 : index
    %c0_0 = arith.constant 0 : index
    %0 = vector.load %arg1[%c0, %c0_0] : memref<16x64xf32, #tpu.memory_space<vmem>>, vector<16x64xf32>
    %1 = arith.truncf %0 : vector<16x64xf32> to vector<16x64xbf16>
    %c0_1 = arith.constant 0 : index
    %c0_2 = arith.constant 0 : index
    %2 = vector.load %arg2[%c0_1, %c0_2] : memref<64x128xbf16, #tpu.memory_space<vmem>>, vector<64x128xbf16>
    %cst = arith.constant dense<0.000000e+00> : vector<16x128xf32>
    %3 = tpu.matmul %1, %2, %cst {dimension_numbers = #tpu.dot_dimension_numbers<[1], [0], [0], [1], [0, 0, 1, 1], [], []>} : vector<16x64xbf16>, vector<64x128xbf16>, vector<16x128xf32> -> vector<16x128xf32>
    %c0_3 = arith.constant 0 : index
    %c0_4 = arith.constant 0 : index
    %4 = vector.load %arg3[%c0_3, %c0_4] : memref<1x128xf32, #tpu.memory_space<vmem>>, vector<1x128xf32>
    %5 = vector.broadcast %4 : vector<1x128xf32> to vector<16x128xf32>
    %6 = arith.addf %3, %5 : vector<16x128xf32>
    %cst_5 = arith.constant 0.000000e+00 : f32
    %7 = vector.broadcast %cst_5 : f32 to vector<16x128xf32>
    %8 = arith.maximumf %6, %7 : vector<16x128xf32>
    %9 = arith.truncf %8 : vector<16x128xf32> to vector<16x128xbf16>
    %c0_6 = arith.constant 0 : index
    %c0_7 = arith.constant 0 : index
    %10 = vector.load %arg4[%c0_6, %c0_7] : memref<128x128xbf16, #tpu.memory_space<vmem>>, vector<128x128xbf16>
    %cst_8 = arith.constant dense<0.000000e+00> : vector<16x128xf32>
    %11 = tpu.matmul %9, %10, %cst_8 {dimension_numbers = #tpu.dot_dimension_numbers<[1], [0], [0], [1], [0, 0, 1, 1], [], []>} : vector<16x128xbf16>, vector<128x128xbf16>, vector<16x128xf32> -> vector<16x128xf32>
    %c0_9 = arith.constant 0 : index
    %c0_10 = arith.constant 0 : index
    %12 = vector.load %arg5[%c0_9, %c0_10] : memref<1x128xf32, #tpu.memory_space<vmem>>, vector<1x128xf32>
    %13 = vector.broadcast %12 : vector<1x128xf32> to vector<16x128xf32>
    %14 = arith.addf %11, %13 : vector<16x128xf32>
    %cst_11 = arith.constant 0.000000e+00 : f32
    %15 = vector.broadcast %cst_11 : f32 to vector<16x128xf32>
    %16 = arith.maximumf %14, %15 : vector<16x128xf32>
    %17 = arith.truncf %16 : vector<16x128xf32> to vector<16x128xbf16>
    %c0_12 = arith.constant 0 : index
    %c0_13 = arith.constant 0 : index
    %18 = vector.load %arg6[%c0_12, %c0_13] : memref<128x128xbf16, #tpu.memory_space<vmem>>, vector<128x128xbf16>
    %cst_14 = arith.constant dense<0.000000e+00> : vector<16x128xf32>
    %19 = tpu.matmul %17, %18, %cst_14 {dimension_numbers = #tpu.dot_dimension_numbers<[1], [0], [0], [1], [0, 0, 1, 1], [], []>} : vector<16x128xbf16>, vector<128x128xbf16>, vector<16x128xf32> -> vector<16x128xf32>
    %c0_15 = arith.constant 0 : index
    %c0_16 = arith.constant 0 : index
    %20 = vector.load %arg7[%c0_15, %c0_16] : memref<1x128xf32, #tpu.memory_space<vmem>>, vector<1x128xf32>
    %21 = vector.broadcast %20 : vector<1x128xf32> to vector<16x128xf32>
    %22 = arith.addf %19, %21 : vector<16x128xf32>
    %cst_17 = arith.constant 0.000000e+00 : f32
    %23 = vector.broadcast %cst_17 : f32 to vector<16x128xf32>
    %24 = arith.maximumf %22, %23 : vector<16x128xf32>
    %25 = arith.truncf %24 : vector<16x128xf32> to vector<16x128xbf16>
    %c0_18 = arith.constant 0 : index
    %c0_19 = arith.constant 0 : index
    %26 = vector.load %arg8[%c0_18, %c0_19] : memref<128x8xbf16, #tpu.memory_space<vmem>>, vector<128x8xbf16>
    %cst_20 = arith.constant dense<0.000000e+00> : vector<16x8xf32>
    %27 = tpu.matmul %25, %26, %cst_20 {dimension_numbers = #tpu.dot_dimension_numbers<[1], [0], [0], [1], [0, 0, 1, 1], [], []>} : vector<16x128xbf16>, vector<128x8xbf16>, vector<16x8xf32> -> vector<16x8xf32>
    %c0_21 = arith.constant 0 : index
    %c0_22 = arith.constant 0 : index
    %28 = vector.load %arg9[%c0_21, %c0_22] : memref<1x8xf32, #tpu.memory_space<vmem>>, vector<1x8xf32>
    %29 = vector.broadcast %28 : vector<1x8xf32> to vector<16x8xf32>
    %30 = arith.addf %27, %29 : vector<16x8xf32>
    %31 = arith.negf %30 : vector<16x8xf32>
    %32 = math.exp %31 : vector<16x8xf32>
    %cst_23 = arith.constant 1.000000e+00 : f32
    %33 = vector.broadcast %cst_23 : f32 to vector<16x8xf32>
    %34 = arith.addf %33, %32 : vector<16x8xf32>
    %35 = arith.divf %33, %34 : vector<16x8xf32>
    %36 = arith.truncf %35 : vector<16x8xf32> to vector<16x8xbf16>
    %c0_24 = arith.constant 0 : index
    %c0_25 = arith.constant 0 : index
    %37 = vector.load %arg10[%c0_24, %c0_25] : memref<16x8xbf16, #tpu.memory_space<vmem>>, vector<16x8xbf16>
    tpu.vector_store %arg10[%c0_24, %c0_25], %36 {strides = array<i32>} : memref<16x8xbf16, #tpu.memory_space<vmem>>, vector<16x8xbf16>,
    return
  }
  func.func @transform_0(%arg0: i32) -> (i32, i32) {
    %c0_i32 = arith.constant 0 : i32
    %c0_i32_0 = arith.constant 0 : i32
    return %arg0, %c0_i32 : i32, i32
  }
  func.func @transform_1(%arg0: i32) -> (i32, i32) {
    %c0_i32 = arith.constant 0 : i32
    %c0_i32_0 = arith.constant 0 : i32
    %c0_i32_1 = arith.constant 0 : i32
    return %c0_i32, %c0_i32_0 : i32, i32
  }
  func.func @transform_2(%arg0: i32) -> (i32, i32) {
    %c0_i32 = arith.constant 0 : i32
    %c0_i32_0 = arith.constant 0 : i32
    %c0_i32_1 = arith.constant 0 : i32
    return %c0_i32, %c0_i32_0 : i32, i32
  }
  func.func @transform_3(%arg0: i32) -> (i32, i32) {
    %c0_i32 = arith.constant 0 : i32
    %c0_i32_0 = arith.constant 0 : i32
    %c0_i32_1 = arith.constant 0 : i32
    return %c0_i32, %c0_i32_0 : i32, i32
  }
  func.func @transform_4(%arg0: i32) -> (i32, i32) {
    %c0_i32 = arith.constant 0 : i32
    %c0_i32_0 = arith.constant 0 : i32
    %c0_i32_1 = arith.constant 0 : i32
    return %c0_i32, %c0_i32_0 : i32, i32
  }
  func.func @transform_5(%arg0: i32) -> (i32, i32) {
    %c0_i32 = arith.constant 0 : i32
    %c0_i32_0 = arith.constant 0 : i32
    %c0_i32_1 = arith.constant 0 : i32
    return %c0_i32, %c0_i32_0 : i32, i32
  }
  func.func @transform_6(%arg0: i32) -> (i32, i32) {
    %c0_i32 = arith.constant 0 : i32
    %c0_i32_0 = arith.constant 0 : i32
    %c0_i32_1 = arith.constant 0 : i32
    return %c0_i32, %c0_i32_0 : i32, i32
  }
  func.func @transform_7(%arg0: i32) -> (i32, i32) {
    %c0_i32 = arith.constant 0 : i32
    %c0_i32_0 = arith.constant 0 : i32
    %c0_i32_1 = arith.constant 0 : i32
    return %c0_i32, %c0_i32_0 : i32, i32
  }
  func.func @transform_8(%arg0: i32) -> (i32, i32) {
    %c0_i32 = arith.constant 0 : i32
    %c0_i32_0 = arith.constant 0 : i32
    %c0_i32_1 = arith.constant 0 : i32
    return %c0_i32, %c0_i32_0 : i32, i32
  }
  func.func @transform_9(%arg0: i32) -> (i32, i32) {
    %c0_i32 = arith.constant 0 : i32
    %c0_i32_0 = arith.constant 0 : i32
    return %arg0, %c0_i32 : i32, i32
  }
}

</mosaic_0001>

<llo_original>
// kernel: _lambda_.1
$region0: #{_lambda_.1}
  #allocation0 [shape = 'u32[]', space=smem, size = 0x4, offset = 0x4, fixed_abs, tag = 'smem constant byte address 0x4 - core index']
  #allocation1 [shape = 'u32[72,128]{1,0:T(1,128)}', space=vmem, size = 0x9000, scoped, tag = 'internal scratch']
  %s0 = inlined_call_operand.vmem [shape: f32[32,64], index: 0, kind: input, shape index: {}]
  %s1 = inlined_call_operand.vmem [shape: bf16[64,128], index: 1, kind: input, shape index: {}]
  %s2 = inlined_call_operand.vmem [shape: f32[1,128], index: 2, kind: input, shape index: {}]
  %s3 = inlined_call_operand.hbm [shape: bf16[128,128], index: 3, kind: input, shape index: {}]
  %s4 = inlined_call_operand.vmem [shape: f32[1,128], index: 4, kind: input, shape index: {}]
  %s5 = inlined_call_operand.hbm [shape: bf16[128,128], index: 5, kind: input, shape index: {}]
  %s6 = inlined_call_operand.vmem [shape: f32[1,128], index: 6, kind: input, shape index: {}]
  %s7 = inlined_call_operand.vmem [shape: bf16[128,8], index: 7, kind: input, shape index: {}]
  %s8 = inlined_call_operand.vmem [shape: f32[1,8], index: 8, kind: input, shape index: {}]
  %s9 = inlined_call_operand.vmem [shape: bf16[32,8], index: 9, kind: output, shape index: {}]
  %s10 = sld [smem:[#allocation0]]
  $region77: #{_lambda_.1} parent=0
    _
  %s12 = ssub.s32 1, %s10
  %s13 = scalar_select 0, %s12, %s10
  $region1: #{_lambda_.1} parent=0
    #allocation2 [shape = 'u8[32768]{0}', space=vmem, size = 0x8000, scoped, tag = 'input window, operand 3, single buffered']
    #allocation3 [shape = 's32[2]{0}', space=sflag, size = 0x8, scoped, tag = 'scoped memory for _lambda_.1']
    #allocation4 [shape = 'u8[32768]{0}', space=vmem, size = 0x8000, scoped, tag = 'input window, operand 5, single buffered']
    #allocation5 [shape = 's32[1]{0}', space=sflag, size = 0x4, scoped, tag = 'scoped memory for _lambda_.1']
    %14 = vsyncpa [#allocation3], 0
    %15 = vsyncpa [#allocation5], 0
    loop: start=0, step=1, limit=4
    $region2: #{_lambda_.1} parent=1 // loop_pre_header
      _
    $region3: #{_lambda_.1} parent=1 // loop_header
      %s17 = sphi 0, %s21
      %p18 = scmp.ge.s32.totalorder %s17, 4
      %s27 = sphi 0, %s29
      %s30 = sphi 0, %s27
      %s31 = sphi 0, %s30
      %s47 = sphi 0, %s31
      %s51 = sphi 0, %s51
      %s53 = sphi 0, %s51
      %s54 = sphi 0, %s53
      %s68 = sphi 0, %s54
      %s72 = sphi 0, %s72
      %s74 = sphi 0, %s72
      %s75 = sphi 0, %s74
      %s89 = sphi 0, %s75
      %s93 = sphi 0, %s93
      %s95 = sphi 0, %s93
      %s96 = sphi 0, %s95
      %s110 = sphi 0, %s96
      %s114 = sphi 0, %s114
      %s116 = sphi 0, %s114
      %s117 = sphi 0, %s116
      %s131 = sphi 0, %s117
      %s135 = sphi 0, %s135
      %s137 = sphi 0, %s135
      %s138 = sphi 0, %s137
      %s152 = sphi 0, %s138
      %s156 = sphi 0, %s156
      %s158 = sphi 0, %s156
      %s159 = sphi 0, %s158
      %s173 = sphi 0, %s159
      %s177 = sphi 0, %s177
      %s179 = sphi 0, %s177
      %s180 = sphi 0, %s179
      %s194 = sphi 0, %s180
      %s198 = sphi 0, %s198
      %s200 = sphi 0, %s198
      %s201 = sphi 0, %s200
      %s215 = sphi 0, %s201
      %s221 = sphi 0, %s223
      %s224 = sphi 0, %s221
      %s225 = sphi 0, %s224
      %s241 = sphi 0, %s225
    $region4: #{_lambda_.1} parent=1 // loop_header_branch
      %20 = sbr.rel (%p18) target = $region8
    $region5: #{_lambda_.1} parent=1 // loop_body
      %s22 = ssub.s32 %s17, 1
      %s23 = ssub.s32 %s17, 2
      %s24 = sadd.s32 %s17, 1
      %s25 = ssub.s32 %s17, %s24
      %p26 = scmp.eq.s32.totalorder %s25, 0
      %s28 = sadd.s32 %s27, 1
      %s29 = scalar_select %p26, %s27, %s28
      %p32 = pneg %p26
      %p33 = scmp.eq.s32.totalorder %s17, 1
      %p34 = por %p32, %p33
      %p35 = scmp.ne.s32.totalorder %s27, %s30
      %p36 = scmp.eq.s32.totalorder %s17, 0
      %p37 = por %p35, %p36
      %p38 = scmp.ne.s32.totalorder %s27, %s30
      %p39 = scmp.eq.s32.totalorder %s22, 1
      %p40 = por %p38, %p39
      %p41 = scmp.ne.s32.totalorder %s30, %s31
      %p42 = scmp.eq.s32.totalorder %s22, 0
      %p43 = por %p41, %p42
      %p44 = scmp.ne.s32.totalorder %s30, %s31
      %p45 = scmp.eq.s32.totalorder %s23, 1
      %p46 = por %p44, %p45
      %p48 = scmp.ne.s32.totalorder %s31, %s47
      %p49 = scmp.eq.s32.totalorder %s23, 0
      %p50 = por %p48, %p49
      %s52 = sadd.s32 %s51, 1
      %p55 = scmp.eq.s32.totalorder %s17, 1
      %p56 = scmp.ne.s32.totalorder %s51, %s53
      %p57 = scmp.eq.s32.totalorder %s17, 0
      %p58 = por %p56, %p57
      %p59 = scmp.ne.s32.totalorder %s51, %s53
      %p60 = scmp.eq.s32.totalorder %s22, 1
      %p61 = por %p59, %p60
      %p62 = scmp.ne.s32.totalorder %s53, %s54
      %p63 = scmp.eq.s32.totalorder %s22, 0
      %p64 = por %p62, %p63
      %p65 = scmp.ne.s32.totalorder %s53, %s54
      %p66 = scmp.eq.s32.totalorder %s23, 1
      %p67 = por %p65, %p66
      %p69 = scmp.ne.s32.totalorder %s54, %s68
      %p70 = scmp.eq.s32.totalorder %s23, 0
      %p71 = por %p69, %p70
      %s73 = sadd.s32 %s72, 1
      %p76 = scmp.eq.s32.totalorder %s17, 1
      %p77 = scmp.ne.s32.totalorder %s72, %s74
      %p78 = scmp.eq.s32.totalorder %s17, 0
      %p79 = por %p77, %p78
      %p80 = scmp.ne.s32.totalorder %s72, %s74
      %p81 = scmp.eq.s32.totalorder %s22, 1
      %p82 = por %p80, %p81
      %p83 = scmp.ne.s32.totalorder %s74, %s75
      %p84 = scmp.eq.s32.totalorder %s22, 0
      %p85 = por %p83, %p84
      %p86 = scmp.ne.s32.totalorder %s74, %s75
      %p87 = scmp.eq.s32.totalorder %s23, 1
      %p88 = por %p86, %p87
      %p90 = scmp.ne.s32.totalorder %s75, %s89
      %p91 = scmp.eq.s32.totalorder %s23, 0
      %p92 = por %p90, %p91
      %s94 = sadd.s32 %s93, 1
      %p97 = scmp.eq.s32.totalorder %s17, 1
      %p98 = scmp.ne.s32.totalorder %s93, %s95
      %p99 = scmp.eq.s32.totalorder %s17, 0
      %p100 = por %p98, %p99
      %p101 = scmp.ne.s32.totalorder %s93, %s95
      %p102 = scmp.eq.s32.totalorder %s22, 1
      %p103 = por %p101, %p102
      %p104 = scmp.ne.s32.totalorder %s95, %s96
      %p105 = scmp.eq.s32.totalorder %s22, 0
      %p106 = por %p104, %p105
      %p107 = scmp.ne.s32.totalorder %s95, %s96
      %p108 = scmp.eq.s32.totalorder %s23, 1
      %p109 = por %p107, %p108
      %p111 = scmp.ne.s32.totalorder %s96, %s110
      %p112 = scmp.eq.s32.totalorder %s23, 0
      %p113 = por %p111, %p112
      %s115 = sadd.s32 %s114, 1
      %p118 = scmp.eq.s32.totalorder %s17, 1
      %p119 = scmp.ne.s32.totalorder %s114, %s116
      %p120 = scmp.eq.s32.totalorder %s17, 0
      %p121 = por %p119, %p120
      %p122 = scmp.ne.s32.totalorder %s114, %s116
      %p123 = scmp.eq.s32.totalorder %s22, 1
      %p124 = por %p122, %p123
      %p125 = scmp.ne.s32.totalorder %s116, %s117
      %p126 = scmp.eq.s32.totalorder %s22, 0
      %p127 = por %p125, %p126
      %p128 = scmp.ne.s32.totalorder %s116, %s117
      %p129 = scmp.eq.s32.totalorder %s23, 1
      %p130 = por %p128, %p129
      %p132 = scmp.ne.s32.totalorder %s117, %s131
      %p133 = scmp.eq.s32.totalorder %s23, 0
      %p134 = por %p132, %p133
      %s136 = sadd.s32 %s135, 1
      %p139 = scmp.eq.s32.totalorder %s17, 1
      %p140 = scmp.ne.s32.totalorder %s135, %s137
      %p141 = scmp.eq.s32.totalorder %s17, 0
      %p142 = por %p140, %p141
      %p143 = scmp.ne.s32.totalorder %s135, %s137
      %p144 = scmp.eq.s32.totalorder %s22, 1
      %p145 = por %p143, %p144
      %p146 = scmp.ne.s32.totalorder %s137, %s138
      %p147 = scmp.eq.s32.totalorder %s22, 0
      %p148 = por %p146, %p147
      %p149 = scmp.ne.s32.totalorder %s137, %s138
      %p150 = scmp.eq.s32.totalorder %s23, 1
      %p151 = por %p149, %p150
      %p153 = scmp.ne.s32.totalorder %s138, %s152
      %p154 = scmp.eq.s32.totalorder %s23, 0
      %p155 = por %p153, %p154
      %s157 = sadd.s32 %s156, 1
      %p160 = scmp.eq.s32.totalorder %s17, 1
      %p161 = scmp.ne.s32.totalorder %s156, %s158
      %p162 = scmp.eq.s32.totalorder %s17, 0
      %p163 = por %p161, %p162
      %p164 = scmp.ne.s32.totalorder %s156, %s158
      %p165 = scmp.eq.s32.totalorder %s22, 1
      %p166 = por %p164, %p165
      %p167 = scmp.ne.s32.totalorder %s158, %s159
      %p168 = scmp.eq.s32.totalorder %s22, 0
      %p169 = por %p167, %p168
      %p170 = scmp.ne.s32.totalorder %s158, %s159
      %p171 = scmp.eq.s32.totalorder %s23, 1
      %p172 = por %p170, %p171
      %p174 = scmp.ne.s32.totalorder %s159, %s173
      %p175 = scmp.eq.s32.totalorder %s23, 0
      %p176 = por %p174, %p175
      %s178 = sadd.s32 %s177, 1
      %p181 = scmp.eq.s32.totalorder %s17, 1
      %p182 = scmp.ne.s32.totalorder %s177, %s179
      %p183 = scmp.eq.s32.totalorder %s17, 0
      %p184 = por %p182, %p183
      %p185 = scmp.ne.s32.totalorder %s177, %s179
      %p186 = scmp.eq.s32.totalorder %s22, 1
      %p187 = por %p185, %p186
      %p188 = scmp.ne.s32.totalorder %s179, %s180
      %p189 = scmp.eq.s32.totalorder %s22, 0
      %p190 = por %p188, %p189
      %p191 = scmp.ne.s32.totalorder %s179, %s180
      %p192 = scmp.eq.s32.totalorder %s23, 1
      %p193 = por %p191, %p192
      %p195 = scmp.ne.s32.totalorder %s180, %s194
      %p196 = scmp.eq.s32.totalorder %s23, 0
      %p197 = por %p195, %p196
      %s199 = sadd.s32 %s198, 1
      %p202 = scmp.eq.s32.totalorder %s17, 1
      %p203 = scmp.ne.s32.totalorder %s198, %s200
      %p204 = scmp.eq.s32.totalorder %s17, 0
      %p205 = por %p203, %p204
      %p206 = scmp.ne.s32.totalorder %s198, %s200
      %p207 = scmp.eq.s32.totalorder %s22, 1
      %p208 = por %p206, %p207
      %p209 = scmp.ne.s32.totalorder %s200, %s201
      %p210 = scmp.eq.s32.totalorder %s22, 0
      %p211 = por %p209, %p210
      %p212 = scmp.ne.s32.totalorder %s200, %s201
      %p213 = scmp.eq.s32.totalorder %s23, 1
      %p214 = por %p212, %p213
      %p216 = scmp.ne.s32.totalorder %s201, %s215
      %p217 = scmp.eq.s32.totalorder %s23, 0
      %p218 = por %p216, %p217
      %s219 = ssub.s32 %s17, %s24
      %p220 = scmp.eq.s32.totalorder %s219, 0
      %s222 = sadd.s32 %s221, 1
      %s223 = scalar_select %p220, %s221, %s222
      %p226 = pneg %p220
      %p227 = scmp.eq.s32.totalorder %s17, 1
      %p228 = por %p226, %p227
      %p229 = scmp.ne.s32.totalorder %s221, %s224
      %p230 = scmp.eq.s32.totalorder %s17, 0
      %p231 = por %p229, %p230
      %p232 = scmp.ne.s32.totalorder %s221, %s224
      %p233 = scmp.eq.s32.totalorder %s22, 1
      %p234 = por %p232, %p233
      %p235 = scmp.ne.s32.totalorder %s224, %s225
      %p236 = scmp.eq.s32.totalorder %s22, 0
      %p237 = por %p235, %p236
      %p238 = scmp.ne.s32.totalorder %s224, %s225
      %p239 = scmp.eq.s32.totalorder %s23, 1
      %p240 = por %p238, %p239
      %p242 = scmp.ne.s32.totalorder %s225, %s241
      %p243 = scmp.eq.s32.totalorder %s23, 0
      %p244 = por %p242, %p243
      %p245 = scmp.le.s32.totalorder 1, %s17
      %p246 = scmp.lt.s32.totalorder %s17, 3
      %p247 = pnand %p245, %p246
      %p248 = pneg %p247
      // Predicated region
      $region9: #{_lambda_.1} parent=5 // pred_check
        _
      $region10: #{_lambda_.1} parent=5 // pred_check_branch
        %250 = sbr.rel (%p247) target = $region12
      $region11: #{_lambda_.1} parent=5 // pred_region
        %s251 = ssub.s32 %s17, 1
        // Predicated region
        $region13: #{_lambda_.1} parent=11 // pred_check
          %p252 = pneg %p64
        $region14: #{_lambda_.1} parent=11 // pred_check_branch
          %254 = sbr.rel (%p252) target = $region16
        $region15: #{_lambda_.1} parent=11 // pred_region
          _
        $region16: #{_lambda_.1} parent=11 // pred_fallthru
          _
        // Predicated region
        $region17: #{_lambda_.1} parent=11 // pred_check
          %p255 = pneg %p85
        $region18: #{_lambda_.1} parent=11 // pred_check_branch
          %257 = sbr.rel (%p255) target = $region20
        $region19: #{_lambda_.1} parent=11 // pred_region
          _
        $region20: #{_lambda_.1} parent=11 // pred_fallthru
          _
        // Predicated region
        $region21: #{_lambda_.1} parent=11 // pred_check
          %p258 = pneg %p106
        $region22: #{_lambda_.1} parent=11 // pred_check_branch
          %260 = sbr.rel (%p258) target = $region24
        $region23: #{_lambda_.1} parent=11 // pred_region
          %262 = vsyncadd [#allocation3], 0
          %s263 = sshll.u32 %s3, 4
          %s264 = int_to_ptr.hbm [resolvable:$true] %s263
          %s265 = sshll.u32 [#allocation2], 4
          %s266 = int_to_ptr.vmem [resolvable:$true] %s265
          %271 = dma.hbm_to_vmem [thread:$0]  %s264, 1024, %s266, [#allocation3], 64, 64, 4
        $region24: #{_lambda_.1} parent=11 // pred_fallthru
          _
        // Predicated region
        $region25: #{_lambda_.1} parent=11 // pred_check
          %p272 = pneg %p127
        $region26: #{_lambda_.1} parent=11 // pred_check_branch
          %274 = sbr.rel (%p272) target = $region28
        $region27: #{_lambda_.1} parent=11 // pred_region
          _
        $region28: #{_lambda_.1} parent=11 // pred_fallthru
          _
        // Predicated region
        $region29: #{_lambda_.1} parent=11 // pred_check
          %p275 = pneg %p148
        $region30: #{_lambda_.1} parent=11 // pred_check_branch
          %277 = sbr.rel (%p275) target = $region32
        $region31: #{_lambda_.1} parent=11 // pred_region
          %279 = vsyncadd [#allocation5], 0
          %s280 = sshll.u32 %s5, 4
          %s281 = int_to_ptr.hbm [resolvable:$true] %s280
          %s282 = sshll.u32 [#allocation4], 4
          %s283 = int_to_ptr.vmem [resolvable:$true] %s282
          %288 = dma.hbm_to_vmem [thread:$0]  %s281, 1024, %s283, [#allocation5], 64, 64, 4
        $region32: #{_lambda_.1} parent=11 // pred_fallthru
          _
        // Predicated region
        $region33: #{_lambda_.1} parent=11 // pred_check
          %p289 = pneg %p169
        $region34: #{_lambda_.1} parent=11 // pred_check_branch
          %291 = sbr.rel (%p289) target = $region36
        $region35: #{_lambda_.1} parent=11 // pred_region
          _
        $region36: #{_lambda_.1} parent=11 // pred_fallthru
          _
        // Predicated region
        $region37: #{_lambda_.1} parent=11 // pred_check
          %p292 = pneg %p190
        $region38: #{_lambda_.1} parent=11 // pred_check_branch
          %294 = sbr.rel (%p292) target = $region40
        $region39: #{_lambda_.1} parent=11 // pred_region
          _
        $region40: #{_lambda_.1} parent=11 // pred_fallthru
          _
        // Predicated region
        $region41: #{_lambda_.1} parent=11 // pred_check
          %p295 = pneg %p211
        $region42: #{_lambda_.1} parent=11 // pred_check_branch
          %297 = sbr.rel (%p295) target = $region44
        $region43: #{_lambda_.1} parent=11 // pred_region
          _
        $region44: #{_lambda_.1} parent=11 // pred_fallthru
          _
      $region12: #{_lambda_.1} parent=5 // pred_fallthru
        _
      %p298 = scmp.lt.s32.totalorder %s17, 2
      // Predicated region
      $region45: #{_lambda_.1} parent=5 // pred_check
        %p299 = pneg %p298
      $region46: #{_lambda_.1} parent=5 // pred_check_branch
        %301 = sbr.rel (%p299) target = $region48
      $region47: #{_lambda_.1} parent=5 // pred_region
        // Predicated region
        $region49: #{_lambda_.1} parent=47 // pred_check
          %p302 = pneg %p37
        $region50: #{_lambda_.1} parent=47 // pred_check_branch
          %304 = sbr.rel (%p302) target = $region52
        $region51: #{_lambda_.1} parent=47 // pred_region
          %s305 = smul.u32 2, %s17
          %p306 = scmp.lt.s32.totalorder %s305, 3
          %s307 = scalar_select %p306, %s305, 3
          %s308 = smul.addr %s307, 8
          %s309 = scalar_lea.vmem %s0, %s308
          %s310 = smul.u32 2, %s17
        $region52: #{_lambda_.1} parent=47 // pred_fallthru
          _
      $region48: #{_lambda_.1} parent=5 // pred_fallthru
        _
      %p311 = scmp.le.s32.totalorder 1, %s17
      %p312 = scmp.lt.s32.totalorder %s17, 3
      %p313 = pnand %p311, %p312
      %p314 = pneg %p313
      // Predicated region
      $region53: #{_lambda_.1} parent=5 // pred_check
        _
      $region54: #{_lambda_.1} parent=5 // pred_check_branch
        %316 = sbr.rel (%p313) target = $region56
      $region55: #{_lambda_.1} parent=5 // pred_region
        %s317 = ssub.s32 %s17, 1
        // Predicated region
        $region57: #{_lambda_.1} parent=55 // pred_check
          %p318 = pneg %p106
        $region58: #{_lambda_.1} parent=55 // pred_check_branch
          %320 = sbr.rel (%p318) target = $region60
        $region59: #{_lambda_.1} parent=55 // pred_region
          %322 = dma.done [#allocation3], 1024
        $region60: #{_lambda_.1} parent=55 // pred_fallthru
          _
        // Predicated region
        $region61: #{_lambda_.1} parent=55 // pred_check
          %p323 = pneg %p148
        $region62: #{_lambda_.1} parent=55 // pred_check_branch
          %325 = sbr.rel (%p323) target = $region64
        $region63: #{_lambda_.1} parent=55 // pred_region
          %327 = dma.done [#allocation5], 1024
        $region64: #{_lambda_.1} parent=55 // pred_fallthru
          _
        %s328 = smul.u32 2, %s22
        %p329 = scmp.lt.s32.totalorder %s328, 3
        %s330 = scalar_select %p329, %s328, 3
        %s331 = smul.addr %s330, 8
        %s332 = scalar_lea.vmem %s0, %s331
        %p333 = pneg %p43
        %p334 = pneg %p40
        %p335 = pneg %p64
        %p336 = pneg %p61
        %p337 = pneg %p85
        %p338 = pneg %p82
        %p339 = pneg %p106
        %p340 = pneg %p103
        %p341 = pneg %p127
        %p342 = pneg %p124
        %p343 = pneg %p148
        %p344 = pneg %p145
        %p345 = pneg %p169
        %p346 = pneg %p166
        %p347 = pneg %p190
        %p348 = pneg %p187
        %p349 = pneg %p211
        %p350 = pneg %p208
        %p351 = pneg %p237
        %p352 = pneg %p234
        %s353 = smul.u32 2, %s22
        %p354 = scmp.lt.s32.totalorder %s353, 3
        %s355 = scalar_select %p354, %s353, 3
        %s356 = smul.addr %s355, 4
        %s357 = scalar_lea.vmem %s9, %s356
        %s358 = smul.u32 2, %s22
        %p359 = scmp.lt.s32.totalorder %s358, 3
        %s360 = scalar_select %p359, %s358, 3
        %s361 = smul.addr %s360, 8
        %s362 = scalar_lea.vmem %s0, %s361
        %s363 = smul.u32 2, %s22
        %s364 = smul.u32 2, %s22
        %p365 = scmp.lt.s32.totalorder %s364, 3
        %s366 = scalar_select %p365, %s364, 3
        %s367 = smul.addr %s366, 4
        %s368 = scalar_lea.vmem %s9, %s367
        %s369 = smul.u32 2, %s22
        %v371 = vld [vmem:[%s362] sm:$0xff]
        %v372 = vld [vmem:[%s362 + $0x8] sm:$0xff]
        %v373 = vpack.c.bf16 %v372, %v371
        %v374 = vld [vmem:[%s1] sm:$0xf]
        %v375 = vld [vmem:[%s1 + $0x4] sm:$0xf]
        %v376 = vld [vmem:[%s1 + $0x8] sm:$0xf]
        %v377 = vld [vmem:[%s1 + $0xc] sm:$0xf]
        %v378 = vld [vmem:[%s1 + $0x10] sm:$0xf]
        %v379 = vld [vmem:[%s1 + $0x14] sm:$0xf]
        %v380 = vld [vmem:[%s1 + $0x18] sm:$0xf]
        %v381 = vld [vmem:[%s1 + $0x1c] sm:$0xf]
        %v382 = vld [vmem:[%s2] sm:$0x1]
        %v384 = vperm.slane %v382, 0
        %v394 = vunpack.c.l.b16 %v374
        %v395 = vunpack.c.l.b16 %v375
        %v396 = vunpack.c.l.b16 %v376
        %v397 = vunpack.c.l.b16 %v377
        %v398 = vunpack.c.l.b16 %v378
        %v399 = vunpack.c.l.b16 %v379
        %v400 = vunpack.c.l.b16 %v380
        %v401 = vunpack.c.l.b16 %v381
        %v402 = vpack.c.b16 %v395, %v394
        %v403 = vpack.c.b16 %v397, %v396
        %v404 = vpack.c.b16 %v399, %v398
        %v405 = vpack.c.b16 %v401, %v400
        %vm410 = vcmask 523264
        %v412 = vsel %vm410, %v373, 0
        %414 = vmatpush.bf16.msra.mxu0 0
        %415 = vmatpush.bf16.msra.mxu0 0
        %416 = vmatpush.bf16.msra.mxu0 0
        %417 = vmatpush.bf16.msra.mxu0 0
        %418 = vmatpush.bf16.msra.mxu0 %v405
        %419 = vmatpush.bf16.msra.mxu0 %v404
        %420 = vmatpush.bf16.msra.mxu0 %v403
        %421 = vmatpush.bf16.msra.mxu0 %v402
        %422 = vmatmul.bf16.gmra.mxu0 %v412
        %v423 = vpop.f32.mrf.mxu0
        %v424 = vadd.f32 %v384, %v423
        %v425 = vpop.f32.mrf.mxu0
        %v426 = vadd.f32 %v384, %v425
        %427 = vdwg.mxu0
        %v428 = vmax.f32 %v424, 0.0
        %v429 = vmax.f32 %v426, 0.0
        %v430 = vpack.c.bf16 %v429, %v428
        %v431 = vld [vmem:[#allocation2] sm:$0xf]
        %v432 = vld [vmem:[#allocation2 + $0x4] sm:$0xf]
        %v433 = vld [vmem:[#allocation2 + $0x8] sm:$0xf]
        %v434 = vld [vmem:[#allocation2 + $0xc] sm:$0xf]
        %v435 = vld [vmem:[#allocation2 + $0x10] sm:$0xf]
        %v436 = vld [vmem:[#allocation2 + $0x14] sm:$0xf]
        %v437 = vld [vmem:[#allocation2 + $0x18] sm:$0xf]
        %v438 = vld [vmem:[#allocation2 + $0x1c] sm:$0xf]
        %v439 = vld [vmem:[#allocation2 + $0x20] sm:$0xf]
        %v440 = vld [vmem:[#allocation2 + $0x24] sm:$0xf]
        %v441 = vld [vmem:[#allocation2 + $0x28] sm:$0xf]
        %v442 = vld [vmem:[#allocation2 + $0x2c] sm:$0xf]
        %v443 = vld [vmem:[#allocation2 + $0x30] sm:$0xf]
        %v444 = vld [vmem:[#allocation2 + $0x34] sm:$0xf]
        %v445 = vld [vmem:[#allocation2 + $0x38] sm:$0xf]
        %v446 = vld [vmem:[#allocation2 + $0x3c] sm:$0xf]
        %v447 = vld [vmem:[%s4] sm:$0x1]
        %v449 = vperm.slane %v447, 0
        %v467 = vunpack.c.l.b16 %v431
        %v468 = vunpack.c.l.b16 %v432
        %v469 = vunpack.c.l.b16 %v433
        %v470 = vunpack.c.l.b16 %v434
        %v471 = vunpack.c.l.b16 %v435
        %v472 = vunpack.c.l.b16 %v436
        %v473 = vunpack.c.l.b16 %v437
        %v474 = vunpack.c.l.b16 %v438
        %v475 = vunpack.c.l.b16 %v439
        %v476 = vunpack.c.l.b16 %v440
        %v477 = vunpack.c.l.b16 %v441
        %v478 = vunpack.c.l.b16 %v442
        %v479 = vunpack.c.l.b16 %v443
        %v480 = vunpack.c.l.b16 %v444
        %v481 = vunpack.c.l.b16 %v445
        %v482 = vunpack.c.l.b16 %v446
        %v483 = vpack.c.b16 %v468, %v467
        %v484 = vpack.c.b16 %v470, %v469
        %v485 = vpack.c.b16 %v472, %v471
        %v486 = vpack.c.b16 %v474, %v473
        %v487 = vpack.c.b16 %v476, %v475
        %v488 = vpack.c.b16 %v478, %v477
        %v489 = vpack.c.b16 %v480, %v479
        %v490 = vpack.c.b16 %v482, %v481
        %499 = vmatpush.bf16.msra.mxu0 %v490
        %500 = vmatpush.bf16.msra.mxu0 %v489
        %501 = vmatpush.bf16.msra.mxu0 %v488
        %502 = vmatpush.bf16.msra.mxu0 %v487
        %503 = vmatpush.bf16.msra.mxu0 %v486
        %504 = vmatpush.bf16.msra.mxu0 %v485
        %505 = vmatpush.bf16.msra.mxu0 %v484
        %506 = vmatpush.bf16.msra.mxu0 %v483
        %507 = vmatmul.bf16.gmra.mxu0 %v430
        %v508 = vpop.f32.mrf.mxu0
        %v509 = vadd.f32 %v449, %v508
        %v510 = vpop.f32.mrf.mxu0
        %v511 = vadd.f32 %v449, %v510
        %512 = vdwg.mxu0
        %v513 = vmax.f32 %v509, 0.0
        %v514 = vmax.f32 %v511, 0.0
        %v515 = vpack.c.bf16 %v514, %v513
        %v516 = vld [vmem:[#allocation4] sm:$0xf]
        %v517 = vld [vmem:[#allocation4 + $0x4] sm:$0xf]
        %v518 = vld [vmem:[#allocation4 + $0x8] sm:$0xf]
        %v519 = vld [vmem:[#allocation4 + $0xc] sm:$0xf]
        %v520 = vld [vmem:[#allocation4 + $0x10] sm:$0xf]
        %v521 = vld [vmem:[#allocation4 + $0x14] sm:$0xf]
        %v522 = vld [vmem:[#allocation4 + $0x18] sm:$0xf]
        %v523 = vld [vmem:[#allocation4 + $0x1c] sm:$0xf]
        %v524 = vld [vmem:[#allocation4 + $0x20] sm:$0xf]
        %v525 = vld [vmem:[#allocation4 + $0x24] sm:$0xf]
        %v526 = vld [vmem:[#allocation4 + $0x28] sm:$0xf]
        %v527 = vld [vmem:[#allocation4 + $0x2c] sm:$0xf]
        %v528 = vld [vmem:[#allocation4 + $0x30] sm:$0xf]
        %v529 = vld [vmem:[#allocation4 + $0x34] sm:$0xf]
        %v530 = vld [vmem:[#allocation4 + $0x38] sm:$0xf]
        %v531 = vld [vmem:[#allocation4 + $0x3c] sm:$0xf]
        %v532 = vld [vmem:[%s6] sm:$0x1]
        %v534 = vperm.slane %v532, 0
        %v552 = vunpack.c.l.b16 %v516
        %v553 = vunpack.c.l.b16 %v517
        %v554 = vunpack.c.l.b16 %v518
        %v555 = vunpack.c.l.b16 %v519
        %v556 = vunpack.c.l.b16 %v520
        %v557 = vunpack.c.l.b16 %v521
        %v558 = vunpack.c.l.b16 %v522
        %v559 = vunpack.c.l.b16 %v523
        %v560 = vunpack.c.l.b16 %v524
        %v561 = vunpack.c.l.b16 %v525
        %v562 = vunpack.c.l.b16 %v526
        %v563 = vunpack.c.l.b16 %v527
        %v564 = vunpack.c.l.b16 %v528
        %v565 = vunpack.c.l.b16 %v529
        %v566 = vunpack.c.l.b16 %v530
        %v567 = vunpack.c.l.b16 %v531
        %v568 = vpack.c.b16 %v553, %v552
        %v569 = vpack.c.b16 %v555, %v554
        %v570 = vpack.c.b16 %v557, %v556
        %v571 = vpack.c.b16 %v559, %v558
        %v572 = vpack.c.b16 %v561, %v560
        %v573 = vpack.c.b16 %v563, %v562
        %v574 = vpack.c.b16 %v565, %v564
        %v575 = vpack.c.b16 %v567, %v566
        %584 = vmatpush.bf16.msra.mxu0 %v575
        %585 = vmatpush.bf16.msra.mxu0 %v574
        %586 = vmatpush.bf16.msra.mxu0 %v573
        %587 = vmatpush.bf16.msra.mxu0 %v572
        %588 = vmatpush.bf16.msra.mxu0 %v571
        %589 = vmatpush.bf16.msra.mxu0 %v570
        %590 = vmatpush.bf16.msra.mxu0 %v569
        %591 = vmatpush.bf16.msra.mxu0 %v568
        %592 = vmatmul.bf16.gmra.mxu0 %v515
        %v593 = vpop.f32.mrf.mxu0
        %v594 = vadd.f32 %v534, %v593
        %v595 = vpop.f32.mrf.mxu0
        %v596 = vadd.f32 %v534, %v595
        %597 = vdwg.mxu0
        %v598 = vmax.f32 %v594, 0.0
        %v599 = vmax.f32 %v596, 0.0
        %v600 = vpack.c.bf16 %v599, %v598
        %v601 = vld [vmem:[%s7] sm:$0xf]
        %v602 = vld [vmem:[%s7 + $0x4] sm:$0xf]
        %v603 = vld [vmem:[%s7 + $0x8] sm:$0xf]
        %v604 = vld [vmem:[%s7 + $0xc] sm:$0xf]
        %v605 = vld [vmem:[%s7 + $0x10] sm:$0xf]
        %v606 = vld [vmem:[%s7 + $0x14] sm:$0xf]
        %v607 = vld [vmem:[%s7 + $0x18] sm:$0xf]
        %v608 = vld [vmem:[%s7 + $0x1c] sm:$0xf]
        %v609 = vld [vmem:[%s7 + $0x20] sm:$0xf]
        %v610 = vld [vmem:[%s7 + $0x24] sm:$0xf]
        %v611 = vld [vmem:[%s7 + $0x28] sm:$0xf]
        %v612 = vld [vmem:[%s7 + $0x2c] sm:$0xf]
        %v613 = vld [vmem:[%s7 + $0x30] sm:$0xf]
        %v614 = vld [vmem:[%s7 + $0x34] sm:$0xf]
        %v615 = vld [vmem:[%s7 + $0x38] sm:$0xf]
        %v616 = vld [vmem:[%s7 + $0x3c] sm:$0xf]
        %v617 = vld [vmem:[%s8] sm:$0x1]
        %v619 = vperm.slane %v617, 0
        %v637 = vunpack.c.l.b16 %v601
        %v638 = vunpack.c.l.b16 %v602
        %v639 = vunpack.c.l.b16 %v603
        %v640 = vunpack.c.l.b16 %v604
        %v641 = vunpack.c.l.b16 %v605
        %v642 = vunpack.c.l.b16 %v606
        %v643 = vunpack.c.l.b16 %v607
        %v644 = vunpack.c.l.b16 %v608
        %v645 = vunpack.c.l.b16 %v609
        %v646 = vunpack.c.l.b16 %v610
        %v647 = vunpack.c.l.b16 %v611
        %v648 = vunpack.c.l.b16 %v612
        %v649 = vunpack.c.l.b16 %v613
        %v650 = vunpack.c.l.b16 %v614
        %v651 = vunpack.c.l.b16 %v615
        %v652 = vunpack.c.l.b16 %v616
        %v653 = vpack.c.b16 %v638, %v637
        %v654 = vpack.c.b16 %v640, %v639
        %v655 = vpack.c.b16 %v642, %v641
        %v656 = vpack.c.b16 %v644, %v643
        %v657 = vpack.c.b16 %v646, %v645
        %v658 = vpack.c.b16 %v648, %v647
        %v659 = vpack.c.b16 %v650, %v649
        %v660 = vpack.c.b16 %v652, %v651
        %669 = vmatpush.bf16.msra.mxu0 %v660
        %670 = vmatpush.bf16.msra.mxu0 %v659
        %671 = vmatpush.bf16.msra.mxu0 %v658
        %672 = vmatpush.bf16.msra.mxu0 %v657
        %673 = vmatpush.bf16.msra.mxu0 %v656
        %674 = vmatpush.bf16.msra.mxu0 %v655
        %675 = vmatpush.bf16.msra.mxu0 %v654
        %676 = vmatpush.bf16.msra.mxu0 %v653
        %677 = vmatmul.bf16.gmra.mxu0 %v600
        %v678 = vpop.f32.mrf.mxu0
        %v679 = vadd.f32 %v619, %v678
        %v680 = vpop.f32.mrf.mxu0
        %v681 = vadd.f32 %v619, %v680
        %682 = vdwg.mxu0
        %v683 = vxor.u32 %v679, 2147483648
        %v684 = vxor.u32 %v681, 2147483648
        %v685 = vmul.f32 %v683, 1.442695
        %v686 = vpow.pop %v685
        %v687 = vmul.f32 %v684, 1.442695
        %v688 = vpow.pop %v687
        %v689 = vadd.f32 %v686, 1.0
        %v690 = vadd.f32 %v688, 1.0
        %v691 = vrcp.pop %v689
        %v692 = vmul.f32 %v689, %v691
        %v693 = vsub.f32 1.0, %v692
        %v694 = vmul.f32 %v691, %v693
        %v695 = vadd.f32 %v691, %v694
        %vm696 = vweird.f32 %v689
        %vm697 = vweird.f32 %v691
        %vm698 = vmor %vm696, %vm697
        %v699 = vsel %vm698, %v691, %v695
        %v700 = vand.u32 2147483647, %v689
        %vm701 = vcmp.eq.f32.partialorder %v700, 8.507059e+37
        %v702 = vand.u32 %v689, 2147483648
        %v703 = vor.u32 1.1754944e-38, %v702
        %v704 = vsel %vm701, %v703, %v699
        %v705 = vmul.f32 1.0, %v704
        %v706 = vrcp.pop %v690
        %v707 = vmul.f32 %v690, %v706
        %v708 = vsub.f32 1.0, %v707
        %v709 = vmul.f32 %v706, %v708
        %v710 = vadd.f32 %v706, %v709
        %vm711 = vweird.f32 %v690
        %vm712 = vweird.f32 %v706
        %vm713 = vmor %vm711, %vm712
        %v714 = vsel %vm713, %v706, %v710
        %v715 = vand.u32 2147483647, %v690
        %vm716 = vcmp.eq.f32.partialorder %v715, 8.507059e+37
        %v717 = vand.u32 %v690, 2147483648
        %v718 = vor.u32 1.1754944e-38, %v717
        %v719 = vsel %vm716, %v718, %v714
        %v720 = vmul.f32 1.0, %v719
        %v721 = vpack.c.bf16 %v705, %v705
        %v722 = vpack.c.bf16 %v720, %v720
        %vm723 = vcmask 60416
        %724 = vst.msk [vmem:[%s368] sm:$0xf] %vm723, %v721
        %725 = vst.msk [vmem:[%s368 + $0x4] sm:$0xf] %vm723, %v722
        %s726 = smul.u32 2, %s22
        %p727 = scmp.lt.s32.totalorder %s726, 3
        %s728 = scalar_select %p727, %s726, 3
        %s729 = smul.addr %s728, 4
        %s730 = scalar_lea.vmem %s9, %s729
        // Predicated region
        $region65: #{_lambda_.1} parent=55 // pred_check
          %p731 = pneg %p234
        $region66: #{_lambda_.1} parent=55 // pred_check_branch
          %733 = sbr.rel (%p731) target = $region68
        $region67: #{_lambda_.1} parent=55 // pred_region
          %s734 = smul.u32 2, %s22
        $region68: #{_lambda_.1} parent=55 // pred_fallthru
          _
      $region56: #{_lambda_.1} parent=5 // pred_fallthru
        _
      %p735 = scmp.le.s32.totalorder 2, %s17
      // Predicated region
      $region69: #{_lambda_.1} parent=5 // pred_check
        %p736 = pneg %p735
      $region70: #{_lambda_.1} parent=5 // pred_check_branch
        %738 = sbr.rel (%p736) target = $region72
      $region71: #{_lambda_.1} parent=5 // pred_region
        %s739 = ssub.s32 %s17, 2
        // Predicated region
        $region73: #{_lambda_.1} parent=71 // pred_check
          %p740 = pneg %p240
        $region74: #{_lambda_.1} parent=71 // pred_check_branch
          %742 = sbr.rel (%p740) target = $region76
        $region75: #{_lambda_.1} parent=71 // pred_region
          %s743 = smul.u32 2, %s23
          %p744 = scmp.lt.s32.totalorder %s743, 3
          %s745 = scalar_select %p744, %s743, 3
          %s746 = smul.addr %s745, 4
          %s747 = scalar_lea.vmem %s9, %s746
        $region76: #{_lambda_.1} parent=71 // pred_fallthru
          _
      $region72: #{_lambda_.1} parent=5 // pred_fallthru
        _
    $region6: #{_lambda_.1} parent=1 // loop_footer
      %s21 = sadd.s32 1, %s17
    $region7: #{_lambda_.1} parent=1 // loop_footer_branch
      %16 = sbr.rel target = $region3
    $region8: #{_lambda_.1} parent=1 // loop_exit
      _
    %748 = vsyncpa [#allocation3], 1
    %s749 = scalar_lea.sflag [#allocation3], 1
    %750 = vsyncpa %s749, 1
    %751 = vsyncpa [#allocation5], 1

</llo_original>
